<compile_context>
chip_gen: v7x
topology: tpu7x:2x2x1
jax: 0.10.0
libtpu: 0.0.40
codegen_flags: <defaults>
</compile_context>

<pallas_src>
import math

import jax
import jax.numpy as jnp
from jax import lax
from jax.experimental import pallas as pl
from jax.experimental.pallas import tpu as pltpu

_LANES = 128
_MAX_BLOCK_ROWS = 4096   # 4096 * 128 * 4B = 2 MiB per f32 block


def _lowbias32(x):
    """High-avalanche 32-bit integer hash (uint32 in, uint32 out)."""
    x = x ^ (x >> 16)
    x = x * jnp.uint32(0x7FEB352D)
    x = x ^ (x >> 15)
    x = x * jnp.uint32(0x846CA68B)
    x = x ^ (x >> 16)
    return x


def _gaussian_noise_kernel(seed_ref, sigma_ref, x_ref, o_ref):
    block_rows, lanes = x_ref.shape
    pid = pl.program_id(0)

    # Global element index: unique across the whole array and all grid steps.
    row = lax.broadcasted_iota(jnp.int32, (block_rows, lanes), 0)
    lane = lax.broadcasted_iota(jnp.int32, (block_rows, lanes), 1)
    idx = (pid * block_rows + row) * lanes + lane

    # Counter-based RNG: two 32-bit draws per element, keyed by a hashed seed
    # (hashing avoids stream overlap between calls with nearby seeds).
    key = _lowbias32(seed_ref[0].astype(jnp.uint32) + jnp.uint32(0x9E3779B9))
    ctr = idx.astype(jnp.uint32) << 1
    b1 = _lowbias32(ctr ^ key)
    b2 = _lowbias32((ctr | jnp.uint32(1)) ^ key)

    # Uniforms strictly inside (0, 1) (24-bit mantissa path, int32-safe),
    # then Box-Muller -> standard normal.
    scale = jnp.float32(1.0 / (1 << 23))
    u1 = ((b1 >> 9).astype(jnp.int32).astype(jnp.float32) + 0.5) * scale
    u2 = ((b2 >> 9).astype(jnp.int32).astype(jnp.float32) + 0.5) * scale
    r = jnp.sqrt(-2.0 * jnp.log(u1))
    z = r * jnp.cos(jnp.float32(2.0 * math.pi) * u2)

    xv = x_ref[...].astype(jnp.float32)   # f32 in-register math (bf16-safe on v5e)
    o_ref[...] = (xv + sigma_ref[0] * z).astype(o_ref.dtype)


def gaussian_noise(x, sigma, seed, *, training=True):
    """y = x + sigma * N(0,1) in training mode; identity otherwise.

    NOTE: `sigma` and `training` must be static Python values (they are module
    attributes in the PyTorch reference); a traced sigma would hit this branch.
    """
    if (not training) or float(sigma) == 0.0:
        return x

    orig_shape = x.shape
    n = x.size
    rows = pl.cdiv(n, _LANES)

    padded = (rows * _LANES != n)
    if padded:
        # Ragged tail (rare for NN activations): one minimal pad copy.
        flat = jnp.pad(x.reshape(-1), (0, rows * _LANES - n))
        x2d = flat.reshape(rows, _LANES)
    else:
        x2d = x.reshape(rows, _LANES)          # free reshape, no copy / no cast

    if rows <= _MAX_BLOCK_ROWS:
        block_rows = rows                      # single block == full array dims
    else:
        block_rows = _MAX_BLOCK_ROWS           # multiple of 8; last block masked
    grid = (pl.cdiv(rows, block_rows),)

    seed_arr = jnp.asarray([seed], dtype=jnp.int32)
    sigma_arr = jnp.asarray([sigma], dtype=jnp.float32)

    out2d = pl.pallas_call(
        _gaussian_noise_kernel,
        out_shape=jax.ShapeDtypeStruct((rows, _LANES), x.dtype),
        grid=grid,
        in_specs=[
            pl.BlockSpec(memory_space=pltpu.MemorySpace.SMEM),   # seed
            pl.BlockSpec(memory_space=pltpu.MemorySpace.SMEM),   # sigma
            pl.BlockSpec((block_rows, _LANES), lambda i: (i, 0)),
        ],
        out_specs=pl.BlockSpec((block_rows, _LANES), lambda i: (i, 0)),
        compiler_params=pltpu.CompilerParams(
            dimension_semantics=("parallel",)),
    )(seed_arr, sigma_arr, x2d)

    if padded:
        return out2d.reshape(-1)[:n].reshape(orig_shape)
    return out2d.reshape(orig_shape)


if __name__ == "__main__":
    key = jax.random.PRNGKey(0)
    # NCHW, matching the PyTorch conv-style input convention.
    x = jax.random.normal(key, (2, 4, 16, 16), dtype=jnp.float32)
    sigma = 0.5

    # Training mode: noise is generated and added inside the Pallas kernel.
    y = jax.block_until_ready(gaussian_noise(x, sigma, seed=0, training=True))
    assert y.shape == x.shape and y.dtype == x.dtype
    assert not bool(jnp.allclose(y, x))

    # The injected noise should look standard normal (loose sanity bounds).
    noise = (y - x) / sigma
    m = float(jnp.mean(noise))
    s = float(jnp.std(noise))
    assert abs(m) < 0.25, m
    assert 0.6 < s < 1.4, s

    # Eval mode (self.training == False): identity, like the PyTorch module.
    y_eval = jax.block_until_ready(gaussian_noise(x, sigma, seed=0, training=False))
    assert bool(jnp.array_equal(y_eval, x))

    print("KERNEL_OK")
</pallas_src>

<mosaic_0001>
module attributes {stable_mosaic.version = 11 : i64} {
  func.func @_gaussian_noise_kernel(%arg0: i32, %arg1: memref<1xi32, #tpu.memory_space<smem>>, %arg2: memref<1xf32, #tpu.memory_space<smem>>, %arg3: memref<16x128xf32, #tpu.memory_space<vmem>>, %arg4: memref<16x128xf32, #tpu.memory_space<vmem>>) attributes {dimension_semantics = [#tpu.dimension_semantics<parallel>], iteration_bounds = array<i64: 1>, scalar_prefetch = 0 : i64, scratch_operands = 0 : i64, tpu.core_type = #tpu.core_type<tc>, window_params = [{transform_indices = @transform_0, window_bounds = array<i64: 1>}, {transform_indices = @transform_1, window_bounds = array<i64: 1>}, {transform_indices = @transform_2, window_bounds = array<i64: 16, 128>}, {transform_indices = @transform_3, window_bounds = array<i64: 16, 128>}]} {
    %0 = tpu.iota {dimensions = array<i32: 0>} : vector<16x128xi32>
    %1 = tpu.iota {dimensions = array<i32: 1>} : vector<16x128xi32>
    %c16_i32 = arith.constant 16 : i32
    %2 = arith.muli %arg0, %c16_i32 : i32
    %3 = vector.broadcast %2 : i32 to vector<16x128xi32>
    %4 = arith.addi %3, %0 : vector<16x128xi32>
    %c128_i32 = arith.constant 128 : i32
    %5 = vector.broadcast %c128_i32 : i32 to vector<16x128xi32>
    %6 = arith.muli %4, %5 : vector<16x128xi32>
    %7 = arith.addi %6, %1 : vector<16x128xi32>
    %c0 = arith.constant 0 : index
    %8 = memref.load %arg1[%c0] : memref<1xi32, #tpu.memory_space<smem>>
    %c-1640531527_i32 = arith.constant -1640531527 : i32
    %9 = arith.addi %8, %c-1640531527_i32 : i32
    %c16_i32_0 = arith.constant 16 : i32
    %10 = arith.shrui %9, %c16_i32_0 : i32
    %11 = arith.xori %9, %10 : i32
    %c2146121005_i32 = arith.constant 2146121005 : i32
    %12 = arith.muli %11, %c2146121005_i32 : i32
    %c15_i32 = arith.constant 15 : i32
    %13 = arith.shrui %12, %c15_i32 : i32
    %14 = arith.xori %12, %13 : i32
    %c-2073254261_i32 = arith.constant -2073254261 : i32
    %15 = arith.muli %14, %c-2073254261_i32 : i32
    %c16_i32_1 = arith.constant 16 : i32
    %16 = arith.shrui %15, %c16_i32_1 : i32
    %17 = arith.xori %15, %16 : i32
    %c1_i32 = arith.constant 1 : i32
    %18 = vector.broadcast %c1_i32 : i32 to vector<16x128xi32>
    %19 = arith.shli %7, %18 : vector<16x128xi32>
    %20 = vector.broadcast %17 : i32 to vector<16x128xi32>
    %21 = arith.xori %19, %20 : vector<16x128xi32>
    %c16_i32_2 = arith.constant 16 : i32
    %22 = vector.broadcast %c16_i32_2 : i32 to vector<16x128xi32>
    %23 = arith.shrui %21, %22 : vector<16x128xi32>
    %24 = arith.xori %21, %23 : vector<16x128xi32>
    %c2146121005_i32_3 = arith.constant 2146121005 : i32
    %25 = vector.broadcast %c2146121005_i32_3 : i32 to vector<16x128xi32>
    %26 = arith.muli %24, %25 : vector<16x128xi32>
    %c15_i32_4 = arith.constant 15 : i32
    %27 = vector.broadcast %c15_i32_4 : i32 to vector<16x128xi32>
    %28 = arith.shrui %26, %27 : vector<16x128xi32>
    %29 = arith.xori %26, %28 : vector<16x128xi32>
    %c-2073254261_i32_5 = arith.constant -2073254261 : i32
    %30 = vector.broadcast %c-2073254261_i32_5 : i32 to vector<16x128xi32>
    %31 = arith.muli %29, %30 : vector<16x128xi32>
    %c16_i32_6 = arith.constant 16 : i32
    %32 = vector.broadcast %c16_i32_6 : i32 to vector<16x128xi32>
    %33 = arith.shrui %31, %32 : vector<16x128xi32>
    %34 = arith.xori %31, %33 : vector<16x128xi32>
    %c1_i32_7 = arith.constant 1 : i32
    %35 = vector.broadcast %c1_i32_7 : i32 to vector<16x128xi32>
    %36 = arith.ori %19, %35 : vector<16x128xi32>
    %37 = vector.broadcast %17 : i32 to vector<16x128xi32>
    %38 = arith.xori %36, %37 : vector<16x128xi32>
    %c16_i32_8 = arith.constant 16 : i32
    %39 = vector.broadcast %c16_i32_8 : i32 to vector<16x128xi32>
    %40 = arith.shrui %38, %39 : vector<16x128xi32>
    %41 = arith.xori %38, %40 : vector<16x128xi32>
    %c2146121005_i32_9 = arith.constant 2146121005 : i32
    %42 = vector.broadcast %c2146121005_i32_9 : i32 to vector<16x128xi32>
    %43 = arith.muli %41, %42 : vector<16x128xi32>
    %c15_i32_10 = arith.constant 15 : i32
    %44 = vector.broadcast %c15_i32_10 : i32 to vector<16x128xi32>
    %45 = arith.shrui %43, %44 : vector<16x128xi32>
    %46 = arith.xori %43, %45 : vector<16x128xi32>
    %c-2073254261_i32_11 = arith.constant -2073254261 : i32
    %47 = vector.broadcast %c-2073254261_i32_11 : i32 to vector<16x128xi32>
    %48 = arith.muli %46, %47 : vector<16x128xi32>
    %c16_i32_12 = arith.constant 16 : i32
    %49 = vector.broadcast %c16_i32_12 : i32 to vector<16x128xi32>
    %50 = arith.shrui %48, %49 : vector<16x128xi32>
    %51 = arith.xori %48, %50 : vector<16x128xi32>
    %c9_i32 = arith.constant 9 : i32
    %52 = vector.broadcast %c9_i32 : i32 to vector<16x128xi32>
    %53 = arith.shrui %34, %52 : vector<16x128xi32>
    %54 = arith.sitofp %53 : vector<16x128xi32> to vector<16x128xf32>
    %cst = arith.constant 5.000000e-01 : f32
    %55 = vector.broadcast %cst : f32 to vector<16x128xf32>
    %56 = arith.addf %54, %55 : vector<16x128xf32>
    %cst_13 = arith.constant 1.1920929E-7 : f32
    %57 = vector.broadcast %cst_13 : f32 to vector<16x128xf32>
    %58 = arith.mulf %56, %57 : vector<16x128xf32>
    %c9_i32_14 = arith.constant 9 : i32
    %59 = vector.broadcast %c9_i32_14 : i32 to vector<16x128xi32>
    %60 = arith.shrui %51, %59 : vector<16x128xi32>
    %61 = arith.sitofp %60 : vector<16x128xi32> to vector<16x128xf32>
    %cst_15 = arith.constant 5.000000e-01 : f32
    %62 = vector.broadcast %cst_15 : f32 to vector<16x128xf32>
    %63 = arith.addf %61, %62 : vector<16x128xf32>
    %cst_16 = arith.constant 1.1920929E-7 : f32
    %64 = vector.broadcast %cst_16 : f32 to vector<16x128xf32>
    %65 = arith.mulf %63, %64 : vector<16x128xf32>
    %66 = math.log %58 : vector<16x128xf32>
    %cst_17 = arith.constant -2.000000e+00 : f32
    %67 = vector.broadcast %cst_17 : f32 to vector<16x128xf32>
    %68 = arith.mulf %67, %66 : vector<16x128xf32>
    %69 = math.sqrt %68 : vector<16x128xf32>
    %cst_18 = arith.constant 6.28318548 : f32
    %70 = vector.broadcast %cst_18 : f32 to vector<16x128xf32>
    %71 = arith.mulf %70, %65 : vector<16x128xf32>
    %72 = math.cos %71 : vector<16x128xf32>
    %73 = arith.mulf %69, %72 : vector<16x128xf32>
    %c0_19 = arith.constant 0 : index
    %c0_20 = arith.constant 0 : index
    %74 = vector.load %arg3[%c0_19, %c0_20] : memref<16x128xf32, #tpu.memory_space<vmem>>, vector<16x128xf32>
    %c0_21 = arith.constant 0 : index
    %75 = memref.load %arg2[%c0_21] : memref<1xf32, #tpu.memory_space<smem>>
    %76 = vector.broadcast %75 : f32 to vector<16x128xf32>
    %77 = arith.mulf %76, %73 : vector<16x128xf32>
    %78 = arith.addf %74, %77 : vector<16x128xf32>
    %c0_22 = arith.constant 0 : index
    %c0_23 = arith.constant 0 : index
    %79 = vector.load %arg4[%c0_22, %c0_23] : memref<16x128xf32, #tpu.memory_space<vmem>>, vector<16x128xf32>
    tpu.vector_store %arg4[%c0_22, %c0_23], %78 {strides = array<i32>} : memref<16x128xf32, #tpu.memory_space<vmem>>, vector<16x128xf32>,
    return
  }
  func.func @transform_0(%arg0: i32) -> i32 {
    %c0_i32 = arith.constant 0 : i32
    %c0_i32_0 = arith.constant 0 : i32
    return %c0_i32 : i32
  }
  func.func @transform_1(%arg0: i32) -> i32 {
    %c0_i32 = arith.constant 0 : i32
    %c0_i32_0 = arith.constant 0 : i32
    return %c0_i32 : i32
  }
  func.func @transform_2(%arg0: i32) -> (i32, i32) {
    %c0_i32 = arith.constant 0 : i32
    %c0_i32_0 = arith.constant 0 : i32
    return %arg0, %c0_i32 : i32, i32
  }
  func.func @transform_3(%arg0: i32) -> (i32, i32) {
    %c0_i32 = arith.constant 0 : i32
    %c0_i32_0 = arith.constant 0 : i32
    return %arg0, %c0_i32 : i32, i32
  }
}

</mosaic_0001>

<llo_original>
// kernel: tpu_custom_call.1
$region0: #{tpu_custom_call.1}
  #allocation0 [shape = 'u32[]', space=smem, size = 0x4, offset = 0x4, fixed_abs, tag = 'smem constant byte address 0x4 - core index']
  #allocation1 [shape = 'u32[144,128]{1,0:T(1,128)}', space=vmem, size = 0x12000, scoped, tag = 'internal scratch']
  #allocation2 [shape = 's32[1]{0:T(128)S(6)}', space=smem, size = 0x200, scoped, tag = 'scoped memory for tpu_custom_call.1']
  #allocation3 [shape = 'f32[1]{0:T(128)S(6)}', space=smem, size = 0x200, scoped, tag = 'scoped memory for tpu_custom_call.1']
  %s0 = inlined_call_operand.<no memory space> [shape: s32[1], index: 0, kind: input, shape index: {}]
  %s1 = inlined_call_operand.<no memory space> [shape: f32[1], index: 1, kind: input, shape index: {}]
  %s2 = inlined_call_operand.hbm [shape: f32[16,128], index: 2, kind: input, shape index: {}]
  %s3 = inlined_call_operand.hbm [shape: f32[16,128], index: 3, kind: output, shape index: {}]
  %s4 = sld [smem:[#allocation0]]
  $region26: #{tpu_custom_call.1} parent=0
    _
  %s6 = ssub.s32 1, %s4
  %s7 = scalar_select 0, %s6, %s4
  %8 = sst [smem:[#allocation2]] %s0
  %9 = sst [smem:[#allocation3]] %s1
  $region1: #{tpu_custom_call.1} parent=0
    #allocation4 [shape = 'u8[8192]{0}', space=vmem, size = 0x2000, scoped, tag = 'input window, operand 2, single buffered']
    #allocation5 [shape = 's32[1]{0}', space=sflag, size = 0x4, scoped, tag = 'scoped memory for tpu_custom_call.1']
    #allocation6 [shape = 's32[1]{0}', space=sflag, size = 0x4, scoped, tag = 'scoped memory for tpu_custom_call.1']
    #allocation7 [shape = 'u8[8192]{0}', space=vmem, size = 0x2000, scoped, tag = 'output window, operand 0, single buffered']
    %10 = vsyncpa [#allocation5], 0
    %11 = vsyncpa [#allocation6], 0
    // Predicated region
    $region2: #{tpu_custom_call.1} parent=1 // pred_check
      _
    $region3: #{tpu_custom_call.1} parent=1 // pred_check_branch
      %13 = sbr.rel (0) target = $region5
    $region4: #{tpu_custom_call.1} parent=1 // pred_region
      _
    $region5: #{tpu_custom_call.1} parent=1 // pred_fallthru
      _
    // Predicated region
    $region6: #{tpu_custom_call.1} parent=1 // pred_check
      _
    $region7: #{tpu_custom_call.1} parent=1 // pred_check_branch
      %15 = sbr.rel (0) target = $region9
    $region8: #{tpu_custom_call.1} parent=1 // pred_region
      _
    $region9: #{tpu_custom_call.1} parent=1 // pred_fallthru
      _
    // Predicated region
    $region10: #{tpu_custom_call.1} parent=1 // pred_check
      _
    $region11: #{tpu_custom_call.1} parent=1 // pred_check_branch
      %17 = sbr.rel (0) target = $region13
    $region12: #{tpu_custom_call.1} parent=1 // pred_region
      %s19 = ssub.s32 256, 256
      %20 = vsyncadd [#allocation5], %s19
      %s21 = sshll.u32 [#allocation4], 4
      %s22 = int_to_ptr.vmem [resolvable:$true] %s21
      %27 = dma.hbm_to_vmem [thread:$0]  %s2, 256, %s22, [#allocation5], 128, 128, 8
    $region13: #{tpu_custom_call.1} parent=1 // pred_fallthru
      _
    // Predicated region
    $region14: #{tpu_custom_call.1} parent=1 // pred_check
      _
    $region15: #{tpu_custom_call.1} parent=1 // pred_check_branch
      %29 = sbr.rel (0) target = $region17
    $region16: #{tpu_custom_call.1} parent=1 // pred_region
      %30 = dma.done [#allocation5], 256
    $region17: #{tpu_custom_call.1} parent=1 // pred_fallthru
      _
    %v31 = vlaneseq
    %v32 = vshrl.u32 %v31, 7
    %v33 = vadd.s32 %v32, 8
    %v34 = vlaneseq
    %v35 = vand.u32 %v34, 127
    %s36 = smul.u32 0, 16
    %v37 = vstv %s36
    %v38 = vadd.s32 %v37, %v32
    %v39 = vadd.s32 %v37, %v33
    %v40 = vmul.u32 %v38, 128
    %v41 = vmul.u32 %v39, 128
    %v42 = vadd.s32 %v40, %v35
    %v43 = vadd.s32 %v41, %v35
    %s44 = sld [smem:[#allocation2]]
    %s45 = sadd.s32 %s44, 2654435769
    %s46 = sshrl.u32 %s45, 16
    %s47 = sxor.u32 %s45, %s46
    %s48 = smul.u32 %s47, 2146121005
    %s49 = sshrl.u32 %s48, 15
    %s50 = sxor.u32 %s48, %s49
    %s51 = smul.u32 %s50, 2221713035
    %s52 = sshrl.u32 %s51, 16
    %s53 = sxor.u32 %s51, %s52
    %v54 = vshll.u32 %v42, 1
    %v55 = vshll.u32 %v43, 1
    %v56 = vstv %s53
    %v57 = vxor.u32 %v54, %v56
    %v58 = vxor.u32 %v55, %v56
    %v59 = vshrl.u32 %v57, 16
    %v60 = vshrl.u32 %v58, 16
    %v61 = vxor.u32 %v57, %v59
    %v62 = vxor.u32 %v58, %v60
    %v63 = vmul.u32 %v61, 2146121005
    %v64 = vmul.u32 %v62, 2146121005
    %v65 = vshrl.u32 %v63, 15
    %v66 = vshrl.u32 %v64, 15
    %v67 = vxor.u32 %v63, %v65
    %v68 = vxor.u32 %v64, %v66
    %v69 = vmul.u32 %v67, 2221713035
    %v70 = vmul.u32 %v68, 2221713035
    %v71 = vshrl.u32 %v69, 16
    %v72 = vshrl.u32 %v70, 16
    %v73 = vxor.u32 %v69, %v71
    %v74 = vxor.u32 %v70, %v72
    %v75 = vor.u32 %v54, 1
    %v76 = vor.u32 %v55, 1
    %v77 = vxor.u32 %v75, %v56
    %v78 = vxor.u32 %v76, %v56
    %v79 = vshrl.u32 %v77, 16
    %v80 = vshrl.u32 %v78, 16
    %v81 = vxor.u32 %v77, %v79
    %v82 = vxor.u32 %v78, %v80
    %v83 = vmul.u32 %v81, 2146121005
    %v84 = vmul.u32 %v82, 2146121005
    %v85 = vshrl.u32 %v83, 15
    %v86 = vshrl.u32 %v84, 15
    %v87 = vxor.u32 %v83, %v85
    %v88 = vxor.u32 %v84, %v86
    %v89 = vmul.u32 %v87, 2221713035
    %v90 = vmul.u32 %v88, 2221713035
    %v91 = vshrl.u32 %v89, 16
    %v92 = vshrl.u32 %v90, 16
    %v93 = vxor.u32 %v89, %v91
    %v94 = vxor.u32 %v90, %v92
    %v95 = vshrl.u32 %v73, 9
    %v96 = vshrl.u32 %v74, 9
    %v97 = vcvt.s32.f32 %v95
    %v98 = vcvt.s32.f32 %v96
    %v99 = vadd.f32 %v97, 0.5
    %v100 = vadd.f32 %v98, 0.5
    %v101 = vmul.f32 %v99, 1.1920929e-07
    %v102 = vmul.f32 %v100, 1.1920929e-07
    %v103 = vshrl.u32 %v93, 9
    %v104 = vshrl.u32 %v94, 9
    %v105 = vcvt.s32.f32 %v103
    %v106 = vcvt.s32.f32 %v104
    %v107 = vadd.f32 %v105, 0.5
    %v108 = vadd.f32 %v106, 0.5
    %v109 = vmul.f32 %v107, 1.1920929e-07
    %v110 = vmul.f32 %v108, 1.1920929e-07
    %v111 = vlog2.pop %v101
    %v112 = vmul.f32 %v111, 0.6931472
    %v113 = vlog2.pop %v102
    %v114 = vmul.f32 %v113, 0.6931472
    %v115 = vmul.f32 %v112, -2.0
    %v116 = vmul.f32 %v114, -2.0
    %v117 = vrsqrt.pop %v115
    %v118 = vmul.f32 %v115, %v117
    %vm119 = vcmp.eq.f32.partialorder %v115, inf
    %v120 = vsel %vm119, %v115, %v118
    %vm121 = vcmp.eq.f32.partialorder %v115, 0.0
    %v122 = vand.u32 %v115, 2147483648
    %v123 = vsel %vm121, %v122, %v120
    %v124 = vrsqrt.pop %v116
    %v125 = vmul.f32 %v116, %v124
    %vm126 = vcmp.eq.f32.partialorder %v116, inf
    %v127 = vsel %vm126, %v116, %v125
    %vm128 = vcmp.eq.f32.partialorder %v116, 0.0
    %v129 = vand.u32 %v116, 2147483648
    %v130 = vsel %vm128, %v129, %v127
    %v131 = vmul.f32 %v109, 6.2831855
    %v132 = vmul.f32 %v110, 6.2831855
    %v133 = vand.u32 2147483647, %v131
    %vm134 = vcmp.le.f32.partialorder %v133, 0.7853982
    %vm135 = vcmp.lt.s32.totalorder %v131, 0
    %v136 = vand.u32 %v131, 2139095040
    %v137 = vshrl.u32 %v136, 23
    %v138 = vsub.s32 %v137, 127
    %v139 = vand.u32 2147483647, %v131
    %v140 = vand.u32 %v139, 8388607
    %v141 = vor.u32 %v140, 8388608
    %v142 = vsub.s32 0, %v141
    %v143 = vadd.s32 %v138, 1
    %vm144 = vcmp.gt.s32.totalorder %v143, 0
    %v145 = vsel %vm144, %v143, 0
    %v146 = vshrl.u32 %v145, 5
    %v147 = vand.u32 %v145, 31
    %v148 = vsub.s32 32, %v147
    %v149 = vshrl.u32 683565275, %v148
    %v150 = vshll.u32 683565275, %v147
    %v151 = vshrl.u32 2475754826, %v148
    %v152 = vor.u32 %v150, %v151
    %v153 = vshll.u32 2475754826, %v147
    %v154 = vshrl.u32 2131351028, %v148
    %v155 = vor.u32 %v153, %v154
    %v156 = vshll.u32 2131351028, %v147
    %v157 = vshrl.u32 2102212464, %v148
    %v158 = vor.u32 %v156, %v157
    %v159 = vshll.u32 2102212464, %v147
    %v160 = vshrl.u32 920167782, %v148
    %v161 = vor.u32 %v159, %v160
    %v162 = vshll.u32 920167782, %v147
    %v163 = vshrl.u32 1326507024, %v148
    %v164 = vor.u32 %v162, %v163
    %vm165 = vcmp.lt.s32.totalorder %v146, 1
    %vm166 = vcmp.lt.s32.totalorder %v146, 2
    %vm167 = vcmp.lt.s32.totalorder %v146, 3
    %vm168 = vcmp.lt.s32.totalorder %v146, 4
    %v169 = vsel %vm165, %v149, %v152
    %v170 = vsel %vm168, %v158, 2102212464
    %v171 = vsel %vm167, %v155, %v170
    %v172 = vsel %vm166, %v169, %v171
    %v173 = vsel %vm165, %v152, %v155
    %v174 = vsel %vm168, %v161, 920167782
    %v175 = vsel %vm167, %v158, %v174
    %v176 = vsel %vm166, %v173, %v175
    %v177 = vsel %vm165, %v155, %v158
    %v178 = vsel %vm168, %v164, 1326507024
    %v179 = vsel %vm167, %v161, %v178
    %v180 = vsel %vm166, %v177, %v179
    %v181 = vshll.u32 %v141, 8
    %v182 = vmul.u32.u64.compose %v181, %v180
    %v183 = vextract.low.u32 %v182
    %v184 = vextract.high.u32 %v182
    %v185 = vmul.u32.u64.compose %v181, %v176
    %v186 = vextract.low.u32 %v185
    %v187 = vextract.high.u32 %v185
    %v188 = vmul.u32 %v181, %v172
    %v189 = vadd.s32 %v184, %v186
    %vm190 = vc.u32 %v184, %v186
    %v191 = vadd.s32 %v187, 1
    %v192 = vsel %vm190, %v191, %v187
    %v193 = vadd.s32 %v188, %v192
    %v194 = vadd.s32 %v193, 536870912
    %v195 = vshrl.u32 %v194, 30
    %v196 = vshll.u32 %v195, 30
    %v197 = vsub.s32 %v193, %v196
    %vm198 = vcmp.lt.s32.totalorder %v197, 0
    %v199 = vsub.s32 0, %v197
    %v200 = vsel %vm198, %v199, %v197
    %v201 = vclz %v200
    %v202 = vsub.s32 %v201, 2
    %vm203 = vcmp.gt.s32.totalorder 0, %v202
    %v204 = vsel %vm203, 0, %v202
    %v205 = vsub.s32 32, %v204
    %v206 = vshll.u32 %v197, %v204
    %v207 = vshrl.u32 %v189, %v205
    %v208 = vor.u32 %v206, %v207
    %v209 = vsub.s32 4294967266, %v204
    %v210 = vadd.s32 %v209, 127
    %v211 = vshll.u32 %v210, 23
    %v212 = vor.u32 4788187, %v211
    %v213 = vand.u32 2147483647, %v212
    %v215 = vcvt.s32.f32 %v208
    %v216 = vmul.f32 %v215, %v213
    %v217 = vxor.u32 %v216, 2147483648
    %v218 = vsel %vm135, %v217, %v216
    %v219 = vsub.s32 4, %v195
    %v220 = vsel %vm135, %v219, %v195
    %v221 = vsel %vm134, %v131, %v218
    %v222 = vsel %vm134, 0, %v220
    %v223 = vcosq.f32.pop %v221
    %v224 = vsinq.f32.pop %v221
    %vm225 = vweird.f32 %v131
    %v226 = vand.u32 %v222, 3
    %vm227 = vcmp.lt.s32.totalorder %v226, 2
    %vm228 = vcmp.eq.s32.totalorder %v226, 0
    %v229 = vxor.u32 %v224, 2147483648
    %v230 = vsel %vm228, %v223, %v229
    %vm231 = vcmp.eq.s32.totalorder %v226, 2
    %v232 = vxor.u32 %v223, 2147483648
    %v233 = vsel %vm231, %v232, %v224
    %v234 = vsel %vm227, %v230, %v233
    %v235 = vsel %vm225, nan, %v234
    %v236 = vand.u32 2147483647, %v132
    %vm237 = vcmp.le.f32.partialorder %v236, 0.7853982
    %vm238 = vcmp.lt.s32.totalorder %v132, 0
    %v239 = vand.u32 %v132, 2139095040
    %v240 = vshrl.u32 %v239, 23
    %v241 = vsub.s32 %v240, 127
    %v242 = vand.u32 2147483647, %v132
    %v243 = vand.u32 %v242, 8388607
    %v244 = vor.u32 %v243, 8388608
    %v245 = vsub.s32 0, %v244
    %v246 = vadd.s32 %v241, 1
    %vm247 = vcmp.gt.s32.totalorder %v246, 0
    %v248 = vsel %vm247, %v246, 0
    %v249 = vshrl.u32 %v248, 5
    %v250 = vand.u32 %v248, 31
    %v251 = vsub.s32 32, %v250
    %v252 = vshrl.u32 683565275, %v251
    %v253 = vshll.u32 683565275, %v250
    %v254 = vshrl.u32 2475754826, %v251
    %v255 = vor.u32 %v253, %v254
    %v256 = vshll.u32 2475754826, %v250
    %v257 = vshrl.u32 2131351028, %v251
    %v258 = vor.u32 %v256, %v257
    %v259 = vshll.u32 2131351028, %v250
    %v260 = vshrl.u32 2102212464, %v251
    %v261 = vor.u32 %v259, %v260
    %v262 = vshll.u32 2102212464, %v250
    %v263 = vshrl.u32 920167782, %v251
    %v264 = vor.u32 %v262, %v263
    %v265 = vshll.u32 920167782, %v250
    %v266 = vshrl.u32 1326507024, %v251
    %v267 = vor.u32 %v265, %v266
    %vm268 = vcmp.lt.s32.totalorder %v249, 1
    %vm269 = vcmp.lt.s32.totalorder %v249, 2
    %vm270 = vcmp.lt.s32.totalorder %v249, 3
    %vm271 = vcmp.lt.s32.totalorder %v249, 4
    %v272 = vsel %vm268, %v252, %v255
    %v273 = vsel %vm271, %v261, 2102212464
    %v274 = vsel %vm270, %v258, %v273
    %v275 = vsel %vm269, %v272, %v274
    %v276 = vsel %vm268, %v255, %v258
    %v277 = vsel %vm271, %v264, 920167782
    %v278 = vsel %vm270, %v261, %v277
    %v279 = vsel %vm269, %v276, %v278
    %v280 = vsel %vm268, %v258, %v261
    %v281 = vsel %vm271, %v267, 1326507024
    %v282 = vsel %vm270, %v264, %v281
    %v283 = vsel %vm269, %v280, %v282
    %v284 = vshll.u32 %v244, 8
    %v285 = vmul.u32.u64.compose %v284, %v283
    %v286 = vextract.low.u32 %v285
    %v287 = vextract.high.u32 %v285
    %v288 = vmul.u32.u64.compose %v284, %v279
    %v289 = vextract.low.u32 %v288
    %v290 = vextract.high.u32 %v288
    %v291 = vmul.u32 %v284, %v275
    %v292 = vadd.s32 %v287, %v289
    %vm293 = vc.u32 %v287, %v289
    %v294 = vadd.s32 %v290, 1
    %v295 = vsel %vm293, %v294, %v290
    %v296 = vadd.s32 %v291, %v295
    %v297 = vadd.s32 %v296, 536870912
    %v298 = vshrl.u32 %v297, 30
    %v299 = vshll.u32 %v298, 30
    %v300 = vsub.s32 %v296, %v299
    %vm301 = vcmp.lt.s32.totalorder %v300, 0
    %v302 = vsub.s32 0, %v300
    %v303 = vsel %vm301, %v302, %v300
    %v304 = vclz %v303
    %v305 = vsub.s32 %v304, 2
    %vm306 = vcmp.gt.s32.totalorder 0, %v305
    %v307 = vsel %vm306, 0, %v305
    %v308 = vsub.s32 32, %v307
    %v309 = vshll.u32 %v300, %v307
    %v310 = vshrl.u32 %v292, %v308
    %v311 = vor.u32 %v309, %v310
    %v312 = vsub.s32 4294967266, %v307
    %v313 = vadd.s32 %v312, 127
    %v314 = vshll.u32 %v313, 23
    %v315 = vor.u32 4788187, %v314
    %v316 = vand.u32 2147483647, %v315
    %v318 = vcvt.s32.f32 %v311
    %v319 = vmul.f32 %v318, %v316
    %v320 = vxor.u32 %v319, 2147483648
    %v321 = vsel %vm238, %v320, %v319
    %v322 = vsub.s32 4, %v298
    %v323 = vsel %vm238, %v322, %v298
    %v324 = vsel %vm237, %v132, %v321
    %v325 = vsel %vm237, 0, %v323
    %v326 = vcosq.f32.pop %v324
    %v327 = vsinq.f32.pop %v324
    %vm328 = vweird.f32 %v132
    %v329 = vand.u32 %v325, 3
    %vm330 = vcmp.lt.s32.totalorder %v329, 2
    %vm331 = vcmp.eq.s32.totalorder %v329, 0
    %v332 = vxor.u32 %v327, 2147483648
    %v333 = vsel %vm331, %v326, %v332
    %vm334 = vcmp.eq.s32.totalorder %v329, 2
    %v335 = vxor.u32 %v326, 2147483648
    %v336 = vsel %vm334, %v335, %v327
    %v337 = vsel %vm330, %v333, %v336
    %v338 = vsel %vm328, nan, %v337
    %v339 = vmul.f32 %v123, %v235
    %v340 = vmul.f32 %v130, %v338
    %v341 = vld [vmem:[#allocation4] sm:$0xff]
    %v342 = vld [vmem:[#allocation4 + $0x8] sm:$0xff]
    %s343 = sld [smem:[#allocation3]]
    %v344 = vstv %s343
    %v345 = vmul.f32 %v344, %v339
    %v346 = vmul.f32 %v344, %v340
    %v347 = vadd.f32 %v341, %v345
    %v348 = vadd.f32 %v342, %v346
    %349 = vst [vmem:[#allocation7] sm:$0xff] %v347
    %350 = vst [vmem:[#allocation7 + $0x8] sm:$0xff] %v348
    // Predicated region
    $region18: #{tpu_custom_call.1} parent=1 // pred_check
      _
    $region19: #{tpu_custom_call.1} parent=1 // pred_check_branch
      %352 = sbr.rel (0) target = $region21
    $region20: #{tpu_custom_call.1} parent=1 // pred_region
      %s354 = ssub.s32 256, 256
      %355 = vsyncadd [#allocation6], %s354
      %s356 = sshll.u32 [#allocation7], 4
      %s357 = int_to_ptr.vmem [resolvable:$true] %s356
      %362 = dma.vmem_to_hbm [thread:$0]  %s357, 256, %s3, [#allocation6], 128, 128, 8
    $region21: #{tpu_custom_call.1} parent=1 // pred_fallthru
      _
    // Predicated region
    $region22: #{tpu_custom_call.1} parent=1 // pred_check
      _
    $region23: #{tpu_custom_call.1} parent=1 // pred_check_branch
      %364 = sbr.rel (0) target = $region25
    $region24: #{tpu_custom_call.1} parent=1 // pred_region
      %365 = dma.done [#allocation6], 256
    $region25: #{tpu_custom_call.1} parent=1 // pred_fallthru
      _
    %366 = vsyncpa [#allocation5], 1
    %367 = vsyncpa [#allocation6], 1

</llo_original>
